<compile_context>
chip_gen: v6e
topology: v6e:2x2x1
jax: 0.10.0
libtpu: 0.0.40
codegen_flags: <defaults>
</compile_context>

<pallas_src>
import numpy as np
import jax
import jax.numpy as jnp
from jax import lax
from jax.experimental import pallas as pl
from jax.experimental.pallas import tpu as pltpu


# ---------------------------------------------------------------------------
# helpers / parameter construction (plain numpy, deterministic)
# ---------------------------------------------------------------------------
def _round_up(x, m):
    return (x + m - 1) // m * m


def _hann_window(n):
    # torch.hann_window(n, periodic=True)
    k = np.arange(n)
    return (0.5 * (1.0 - np.cos(2.0 * np.pi * k / n))).astype(np.float32)


def _packed_dft_matrices(n_fft, window):
    """Nyquist-packed fused real-DFT matrices (no lane padding).

    fp = n_fft // 2 (an exact multiple of 128 when n_fft % 256 == 0).

      Wf (n_fft, 2*fp):  frames @ Wf = [re | im'] with
          re[:, k]  = Re X_k                   (k = 0..fp-1, analysis window folded in)
          im'[:, 0] = Re X_{N/2}  (Nyquist, real) packed into the DC-imag slot
          im'[:, k] = Im X_k                   (k >= 1)

      Wi_re (fp, n_fft), Wi_im (fp, n_fft):
          re' @ Wi_re + im' @ Wi_im = irfft frames with the 1/N scaling and the
          synthesis window folded in.
    """
    fp = n_fft // 2
    w = window.astype(np.float64)

    n = np.arange(n_fft)[:, None].astype(np.float64)
    k = np.arange(fp)[None, :].astype(np.float64)
    ang = 2.0 * np.pi * n * k / n_fft
    wf = np.zeros((n_fft, 2 * fp), np.float64)
    wf[:, :fp] = w[:, None] * np.cos(ang)                      # Re X_0 .. X_{fp-1}
    wf[:, fp:] = -w[:, None] * np.sin(ang)                     # Im X_0(=0), X_1, ...
    wf[:, fp] = w * np.cos(np.pi * np.arange(n_fft))           # Nyquist (real) -> im'[:,0]

    m = np.arange(n_fft)[None, :].astype(np.float64)
    kk = np.arange(fp)[:, None].astype(np.float64)
    ang_i = 2.0 * np.pi * kk * m / n_fft
    wk = np.full((fp, 1), 2.0)
    wk[0, 0] = 1.0                                             # DC weight
    wi_re = wk * np.cos(ang_i) / n_fft * w[None, :]
    wi_im = -wk * np.sin(ang_i) / n_fft * w[None, :]
    wi_im[0, :] = np.cos(np.pi * np.arange(n_fft)) / n_fft * w  # Nyquist row (weight 1)

    return (wf.astype(np.float32), wi_re.astype(np.float32), wi_im.astype(np.float32))


# ---------------------------------------------------------------------------
# Pallas kernel: fused STFT -> denoise -> inverse STFT  (one frame tile / step)
# ---------------------------------------------------------------------------
def _denoise_kernel(frames_ref, wf_ref, bias_ref, wire_ref, wiim_ref, out_ref):
    fp = bias_ref.shape[-1]                        # n_fft // 2 (multiple of 128)
    f = frames_ref[...]                            # (TILE_F, n_fft), matmul dtype

    # fused forward rDFT: one MXU dot -> [re | im'] (Nyquist packed into im'[:,0])
    reim = jnp.dot(f, wf_ref[...], preferred_element_type=jnp.float32)
    re = reim[:, :fp]
    im = reim[:, fp:]

    # magnitude denoise, rsqrt form (EUP).  Column 0 carries TWO independent
    # real-valued bins (DC in `re`, Nyquist in `im`), so its scale is computed
    # from the single component instead of the combined magnitude.
    bias = bias_ref[...]                           # (2, fp) f32, strength folded in
    col0 = lax.broadcasted_iota(jnp.int32, (1, fp), 1) == 0
    msq = re * re + im * im
    msq_re = jnp.where(col0, re * re, msq)
    msq_im = jnp.where(col0, im * im, msq)
    scale_re = jnp.maximum(1.0 - bias[0:1] * lax.rsqrt(jnp.maximum(msq_re, 1e-30)), 0.0)
    scale_im = jnp.maximum(1.0 - bias[1:2] * lax.rsqrt(jnp.maximum(msq_im, 1e-30)), 0.0)

    re_d = (re * scale_re).astype(wire_ref.dtype)
    im_d = (im * scale_im).astype(wiim_ref.dtype)

    # inverse rDFT + synthesis window: two accumulated MXU dots (no concat copy)
    out_ref[...] = (
        jnp.dot(re_d, wire_ref[...], preferred_element_type=jnp.float32)
        + jnp.dot(im_d, wiim_ref[...], preferred_element_type=jnp.float32))


def _vmem_limit_bytes():
    # Generation-aware scoped-VMEM request (v7x only has 64 MiB physical VMEM).
    # The try/except here only guards a hardware-info query; it cannot mask a
    # kernel lowering error (we always build the same pallas_call).
    try:
        cap = pltpu.get_tpu_info().vmem_capacity_bytes
    except Exception:
        cap = 64 * 1024 * 1024                     # conservative (v7x) default
    return int(min(96 * 1024 * 1024, 0.75 * cap))


def _run_denoise_pallas(frames, wf, bias_scaled, wi_re, wi_im, tile_f):
    rows, n_fft = frames.shape
    fp = bias_scaled.shape[-1]
    assert rows % tile_f == 0
    grid = (rows // tile_f,)

    return pl.pallas_call(
        _denoise_kernel,
        out_shape=jax.ShapeDtypeStruct((rows, n_fft), jnp.float32),
        grid_spec=pltpu.PrefetchScalarGridSpec(
            num_scalar_prefetch=0,
            grid=grid,
            in_specs=[
                pl.BlockSpec((tile_f, n_fft), lambda i: (i, 0)),
                # Constant matrices: block index never changes, so the pipeline
                # fetches them once (no per-step HBM re-streaming).  At bf16 the
                # default double-buffer VMEM cost is small, so no Buffered(1)
                # special-casing (and no brittle try/except) is needed.
                pl.BlockSpec((n_fft, 2 * fp), lambda i: (0, 0)),
                pl.BlockSpec((2, fp), lambda i: (0, 0)),
                pl.BlockSpec((fp, n_fft), lambda i: (0, 0)),
                pl.BlockSpec((fp, n_fft), lambda i: (0, 0)),
            ],
            out_specs=pl.BlockSpec((tile_f, n_fft), lambda i: (i, 0)),
        ),
        compiler_params=pltpu.CompilerParams(
            dimension_semantics=("parallel",),
            vmem_limit_bytes=_vmem_limit_bytes(),
        ),
    )(frames, wf, bias_scaled, wi_re, wi_im)


# plain-JAX mirror of the kernel math, used only for validation in __main__
def _denoise_frames_reference(frames, wf, bias_scaled, wi_re, wi_im):
    fp = bias_scaled.shape[-1]
    reim = jnp.dot(frames.astype(jnp.float32), wf, precision=lax.Precision.HIGHEST)
    re, im = reim[:, :fp], reim[:, fp:]
    col0 = (jnp.arange(fp) == 0)[None, :]
    msq = re * re + im * im
    msq_re = jnp.where(col0, re * re, msq)
    msq_im = jnp.where(col0, im * im, msq)
    scale_re = jnp.maximum(1.0 - bias_scaled[0:1] * lax.rsqrt(jnp.maximum(msq_re, 1e-30)), 0.0)
    scale_im = jnp.maximum(1.0 - bias_scaled[1:2] * lax.rsqrt(jnp.maximum(msq_im, 1e-30)), 0.0)
    return (jnp.dot(re * scale_re, wi_re, precision=lax.Precision.HIGHEST)
            + jnp.dot(im * scale_im, wi_im, precision=lax.Precision.HIGHEST))


# ---------------------------------------------------------------------------
# layout glue: framing / overlap-add (plain JAX)
# ---------------------------------------------------------------------------
def _frame(audio, n_fft, hop):
    # center=True, pad_mode="reflect" (torch.stft defaults used by torchaudio).
    # TODO(synk): for a further ~4x cut in input HBM traffic, pass the padded
    # audio with memory_space=pl.ANY and build the frame tile in VMEM via
    # manual DMA instead of materializing the overlapped frames here.
    pad = n_fft // 2
    padded = jnp.pad(audio, ((0, 0), (pad, pad)), mode="reflect")
    T = audio.shape[1]
    n_frames = 1 + T // hop
    idx = jnp.arange(n_frames)[:, None] * hop + jnp.arange(n_fft)[None, :]
    return padded[:, idx]                                       # (B, n_frames, n_fft)


def _overlap_add(frames, hop):
    B, n_frames, n_fft = frames.shape
    out_len = (n_frames - 1) * hop + n_fft
    y = jnp.zeros((B, out_len), frames.dtype)
    for p in range(n_fft // hop):
        chunk = frames[:, :, p * hop:(p + 1) * hop].reshape(B, n_frames * hop)
        y = y.at[:, p * hop: p * hop + n_frames * hop].add(chunk)
    return y


# ---------------------------------------------------------------------------
# Denoiser module (JAX / Pallas)
# ---------------------------------------------------------------------------
class Denoiser:
    """Removes "model bias" from audio (JAX/Pallas port of the torch module)."""

    def __init__(self, bias_audio, filter_length=1024, n_overlap=4,
                 win_length=1024, mode="zeros", matmul_dtype=jnp.bfloat16):
        # TODO(synk): no hifigan checkpoint available; the caller supplies a
        # deterministic synthetic bias_audio (1, T) standing in for
        # `hifigan(mel_input)` from the original __init__.
        self.n_fft = int(filter_length)
        self.hop = int(filter_length // n_overlap)
        self.fp = self.n_fft // 2
        # (8,128) tiling + Nyquist packing need n_fft/2 to be a lane multiple.
        assert self.n_fft % 256 == 0, "filter_length must be a multiple of 256"
        assert win_length == filter_length, "win_length != filter_length unsupported"
        assert self.n_fft % self.hop == 0

        window = _hann_window(int(win_length))
        self._window_np = window
        wf_np, wire_np, wiim_np = _packed_dft_matrices(self.n_fft, window)

        # bias_spec = |STFT(bias_audio)|[:, :, 0] in packed layout, (2, fp) f32:
        #   row 0: [|DC|,      |X_1|, ..., |X_{fp-1}|]   (applied to `re`)
        #   row 1: [|Nyquist|, |X_1|, ..., |X_{fp-1}|]   (applied to `im`)
        bframes = _frame(jnp.asarray(bias_audio, jnp.float32), self.n_fft, self.hop)
        reim0 = jnp.dot(bframes[0, 0], jnp.asarray(wf_np),
                        precision=lax.Precision.HIGHEST)        # (2*fp,)
        re0, im0 = reim0[:self.fp], reim0[self.fp:]
        mag = jnp.sqrt(re0 * re0 + im0 * im0)
        bias_re = mag.at[0].set(jnp.abs(re0[0]))
        bias_im = mag.at[0].set(jnp.abs(im0[0]))
        self.bias_spec = jnp.stack([bias_re, bias_im], axis=0)   # (2, fp) f32

        # bf16 matrices by default: MXU-native on v5e/v6e/v7x and half the VMEM.
        # TODO(synk): validate spectral accuracy vs matmul_dtype=float32 before
        # enabling in serving if bit-accuracy matters.
        self.matmul_dtype = matmul_dtype
        self.wf = jnp.asarray(wf_np).astype(matmul_dtype)
        self.wi_re = jnp.asarray(wire_np).astype(matmul_dtype)
        self.wi_im = jnp.asarray(wiim_np).astype(matmul_dtype)

        self._env_cache = {}                                     # n_frames -> envelope

    def _window_envelope(self, n_frames):
        env = self._env_cache.get(n_frames)
        if env is None:
            out_len = (n_frames - 1) * self.hop + self.n_fft
            wsq = self._window_np.astype(np.float64) ** 2
            e = np.zeros(out_len, np.float64)
            for i in range(n_frames):
                e[i * self.hop: i * self.hop + self.n_fft] += wsq
            env = jnp.asarray(np.maximum(e, 1e-11), jnp.float32)[None, :]
            self._env_cache[n_frames] = env
        return env

    def __call__(self, audio, strength=0.1, use_pallas=True):
        audio = jnp.asarray(audio, jnp.float32)
        B = audio.shape[0]
        frames = _frame(audio, self.n_fft, self.hop)             # (B, nF, n_fft)
        n_frames = frames.shape[1]

        # flatten (B, n_frames) -> rows and tile the row axis for the MXU.
        # Frames are materialized in the matmul dtype (bf16 by default), which
        # halves the 4x-redundant framed-input HBM traffic.
        rows = B * n_frames
        flat = frames.reshape(rows, self.n_fft).astype(self.matmul_dtype)
        # up to 512 rows/tile; keep the grid even so both v7x TensorCores get work.
        tile_f = min(512, _round_up((rows + 1) // 2, 8))
        rows_pad = _round_up(rows, 2 * tile_f)
        if rows_pad != rows:
            flat = jnp.pad(flat, ((0, rows_pad - rows), (0, 0)))

        # bias*strength precomputed outside the kernel (no recompiles on strength)
        bias_scaled = self.bias_spec * jnp.float32(strength)     # (2, fp)

        if use_pallas:
            y_flat = _run_denoise_pallas(flat, self.wf, bias_scaled,
                                         self.wi_re, self.wi_im, tile_f)
        else:
            y_flat = _denoise_frames_reference(
                flat, self.wf.astype(jnp.float32), bias_scaled,
                self.wi_re.astype(jnp.float32), self.wi_im.astype(jnp.float32))
        y_frames = y_flat[:rows].reshape(B, n_frames, self.n_fft)

        # overlap-add + cached window-envelope normalization (torch.istft semantics)
        y = _overlap_add(y_frames, self.hop)
        y = y / self._window_envelope(n_frames)
        pad = self.n_fft // 2
        out_len = (n_frames - 1) * self.hop       # torch.istft(length=None)
        return y[:, pad: pad + out_len]


# ---------------------------------------------------------------------------
if __name__ == "__main__":
    key = jax.random.PRNGKey(0)
    k_audio, k_bias = jax.random.split(key)

    # small shapes: B=2 waveforms of 2048 samples, filter_length=256, hop=64
    B, T = 2, 2048
    filter_length, n_overlap = 256, 4

    audio = jax.random.normal(k_audio, (B, T), dtype=jnp.float32)
    bias_audio = 0.01 * jax.random.normal(k_bias, (1, T), dtype=jnp.float32)

    denoiser = Denoiser(bias_audio, filter_length=filter_length,
                        n_overlap=n_overlap, win_length=filter_length)

    out = jax.block_until_ready(denoiser(audio, strength=0.1))
    assert out.shape == (B, T), out.shape
    assert bool(jnp.all(jnp.isfinite(out)))

    # cross-check the Pallas kernel against the plain-JAX reference path
    ref = jax.block_until_ready(denoiser(audio, strength=0.1, use_pallas=False))
    max_err = float(jnp.max(jnp.abs(out - ref)))
    assert max_err < 5e-2, max_err

    print("KERNEL_OK")
</pallas_src>

<mosaic_0001>
module attributes {stable_mosaic.version = 11 : i64} {
  func.func @_denoise_kernel(%arg0: i32, %arg1: memref<40x256xbf16, #tpu.memory_space<vmem>>, %arg2: memref<256x256xbf16, #tpu.memory_space<vmem>>, %arg3: memref<2x128xf32, #tpu.memory_space<vmem>>, %arg4: memref<128x256xbf16, #tpu.memory_space<vmem>>, %arg5: memref<128x256xbf16, #tpu.memory_space<vmem>>, %arg6: memref<40x256xf32, #tpu.memory_space<vmem>>) attributes {dimension_semantics = [#tpu.dimension_semantics<parallel>], iteration_bounds = array<i64: 2>, scalar_prefetch = 0 : i64, scratch_operands = 0 : i64, tpu.core_type = #tpu.core_type<tc>, window_params = [{transform_indices = @transform_0, window_bounds = array<i64: 40, 256>}, {pipeline_mode = #tpu.pipeline_mode<synchronous>, transform_indices = @transform_1, window_bounds = array<i64: 256, 256>}, {pipeline_mode = #tpu.pipeline_mode<synchronous>, transform_indices = @transform_2, window_bounds = array<i64: 2, 128>}, {pipeline_mode = #tpu.pipeline_mode<synchronous>, transform_indices = @transform_3, window_bounds = array<i64: 128, 256>}, {pipeline_mode = #tpu.pipeline_mode<synchronous>, transform_indices = @transform_4, window_bounds = array<i64: 128, 256>}, {transform_indices = @transform_5, window_bounds = array<i64: 40, 256>}]} {
    %c0 = arith.constant 0 : index
    %c0_0 = arith.constant 0 : index
    %0 = vector.load %arg1[%c0, %c0_0] : memref<40x256xbf16, #tpu.memory_space<vmem>>, vector<40x256xbf16>
    %c0_1 = arith.constant 0 : index
    %c0_2 = arith.constant 0 : index
    %1 = vector.load %arg2[%c0_1, %c0_2] : memref<256x256xbf16, #tpu.memory_space<vmem>>, vector<256x256xbf16>
    %cst = arith.constant dense<0.000000e+00> : vector<40x256xf32>
    %2 = tpu.matmul %0, %1, %cst {dimension_numbers = #tpu.dot_dimension_numbers<[1], [0], [0], [1], [0, 0, 1, 1], [], []>} : vector<40x256xbf16>, vector<256x256xbf16>, vector<40x256xf32> -> vector<40x256xf32>
    %3 = vector.extract_strided_slice %2 {offsets = [0, 0], sizes = [40, 128], strides = [1, 1]} : vector<40x256xf32> to vector<40x128xf32>
    %4 = vector.extract_strided_slice %2 {offsets = [0, 128], sizes = [40, 128], strides = [1, 1]} : vector<40x256xf32> to vector<40x128xf32>
    %c0_3 = arith.constant 0 : index
    %c0_4 = arith.constant 0 : index
    %5 = vector.load %arg3[%c0_3, %c0_4] : memref<2x128xf32, #tpu.memory_space<vmem>>, vector<2x128xf32>
    %6 = tpu.iota {dimensions = array<i32: 1>} : vector<1x128xi32>
    %c0_i32 = arith.constant 0 : i32
    %7 = vector.broadcast %c0_i32 : i32 to vector<1x128xi32>
    %8 = arith.cmpi eq, %6, %7 : vector<1x128xi32>
    %9 = arith.mulf %3, %3 : vector<40x128xf32>
    %10 = arith.mulf %4, %4 : vector<40x128xf32>
    %11 = arith.addf %9, %10 : vector<40x128xf32>
    %12 = arith.mulf %3, %3 : vector<40x128xf32>
    %13 = vector.shape_cast %8 : vector<1x128xi1> to vector<1x128xi1>
    %14 = vector.broadcast %13 : vector<1x128xi1> to vector<40x128xi1>
    %15 = arith.select %14, %12, %11 : vector<40x128xi1>, vector<40x128xf32>
    %16 = arith.mulf %4, %4 : vector<40x128xf32>
    %17 = vector.shape_cast %8 : vector<1x128xi1> to vector<1x128xi1>
    %18 = vector.broadcast %17 : vector<1x128xi1> to vector<40x128xi1>
    %19 = arith.select %18, %16, %11 : vector<40x128xi1>, vector<40x128xf32>
    %20 = vector.extract_strided_slice %5 {offsets = [0, 0], sizes = [1, 128], strides = [1, 1]} : vector<2x128xf32> to vector<1x128xf32>
    %cst_5 = arith.constant 1.000000e-30 : f32
    %21 = vector.broadcast %cst_5 : f32 to vector<40x128xf32>
    %22 = arith.maximumf %15, %21 : vector<40x128xf32>
    %23 = math.rsqrt %22 : vector<40x128xf32>
    %24 = vector.broadcast %20 : vector<1x128xf32> to vector<40x128xf32>
    %25 = arith.mulf %24, %23 : vector<40x128xf32>
    %cst_6 = arith.constant 1.000000e+00 : f32
    %26 = vector.broadcast %cst_6 : f32 to vector<40x128xf32>
    %27 = arith.subf %26, %25 : vector<40x128xf32>
    %cst_7 = arith.constant 0.000000e+00 : f32
    %28 = vector.broadcast %cst_7 : f32 to vector<40x128xf32>
    %29 = arith.maximumf %27, %28 : vector<40x128xf32>
    %30 = vector.extract_strided_slice %5 {offsets = [1, 0], sizes = [1, 128], strides = [1, 1]} : vector<2x128xf32> to vector<1x128xf32>
    %cst_8 = arith.constant 1.000000e-30 : f32
    %31 = vector.broadcast %cst_8 : f32 to vector<40x128xf32>
    %32 = arith.maximumf %19, %31 : vector<40x128xf32>
    %33 = math.rsqrt %32 : vector<40x128xf32>
    %34 = vector.broadcast %30 : vector<1x128xf32> to vector<40x128xf32>
    %35 = arith.mulf %34, %33 : vector<40x128xf32>
    %cst_9 = arith.constant 1.000000e+00 : f32
    %36 = vector.broadcast %cst_9 : f32 to vector<40x128xf32>
    %37 = arith.subf %36, %35 : vector<40x128xf32>
    %cst_10 = arith.constant 0.000000e+00 : f32
    %38 = vector.broadcast %cst_10 : f32 to vector<40x128xf32>
    %39 = arith.maximumf %37, %38 : vector<40x128xf32>
    %40 = arith.mulf %3, %29 : vector<40x128xf32>
    %41 = arith.truncf %40 : vector<40x128xf32> to vector<40x128xbf16>
    %42 = arith.mulf %4, %39 : vector<40x128xf32>
    %43 = arith.truncf %42 : vector<40x128xf32> to vector<40x128xbf16>
    %c0_11 = arith.constant 0 : index
    %c0_12 = arith.constant 0 : index
    %44 = vector.load %arg4[%c0_11, %c0_12] : memref<128x256xbf16, #tpu.memory_space<vmem>>, vector<128x256xbf16>
    %cst_13 = arith.constant dense<0.000000e+00> : vector<40x256xf32>
    %45 = tpu.matmul %41, %44, %cst_13 {dimension_numbers = #tpu.dot_dimension_numbers<[1], [0], [0], [1], [0, 0, 1, 1], [], []>} : vector<40x128xbf16>, vector<128x256xbf16>, vector<40x256xf32> -> vector<40x256xf32>
    %c0_14 = arith.constant 0 : index
    %c0_15 = arith.constant 0 : index
    %46 = vector.load %arg5[%c0_14, %c0_15] : memref<128x256xbf16, #tpu.memory_space<vmem>>, vector<128x256xbf16>
    %cst_16 = arith.constant dense<0.000000e+00> : vector<40x256xf32>
    %47 = tpu.matmul %43, %46, %cst_16 {dimension_numbers = #tpu.dot_dimension_numbers<[1], [0], [0], [1], [0, 0, 1, 1], [], []>} : vector<40x128xbf16>, vector<128x256xbf16>, vector<40x256xf32> -> vector<40x256xf32>
    %48 = arith.addf %45, %47 : vector<40x256xf32>
    %c0_17 = arith.constant 0 : index
    %c0_18 = arith.constant 0 : index
    %49 = vector.load %arg6[%c0_17, %c0_18] : memref<40x256xf32, #tpu.memory_space<vmem>>, vector<40x256xf32>
    tpu.vector_store %arg6[%c0_17, %c0_18], %48 {strides = array<i32>} : memref<40x256xf32, #tpu.memory_space<vmem>>, vector<40x256xf32>,
    return
  }
  func.func @transform_0(%arg0: i32) -> (i32, i32) {
    %c0_i32 = arith.constant 0 : i32
    %c0_i32_0 = arith.constant 0 : i32
    return %arg0, %c0_i32 : i32, i32
  }
  func.func @transform_1(%arg0: i32) -> (i32, i32) {
    %c0_i32 = arith.constant 0 : i32
    %c0_i32_0 = arith.constant 0 : i32
    %c0_i32_1 = arith.constant 0 : i32
    return %c0_i32, %c0_i32_0 : i32, i32
  }
  func.func @transform_2(%arg0: i32) -> (i32, i32) {
    %c0_i32 = arith.constant 0 : i32
    %c0_i32_0 = arith.constant 0 : i32
    %c0_i32_1 = arith.constant 0 : i32
    return %c0_i32, %c0_i32_0 : i32, i32
  }
  func.func @transform_3(%arg0: i32) -> (i32, i32) {
    %c0_i32 = arith.constant 0 : i32
    %c0_i32_0 = arith.constant 0 : i32
    %c0_i32_1 = arith.constant 0 : i32
    return %c0_i32, %c0_i32_0 : i32, i32
  }
  func.func @transform_4(%arg0: i32) -> (i32, i32) {
    %c0_i32 = arith.constant 0 : i32
    %c0_i32_0 = arith.constant 0 : i32
    %c0_i32_1 = arith.constant 0 : i32
    return %c0_i32, %c0_i32_0 : i32, i32
  }
  func.func @transform_5(%arg0: i32) -> (i32, i32) {
    %c0_i32 = arith.constant 0 : i32
    %c0_i32_0 = arith.constant 0 : i32
    return %arg0, %c0_i32 : i32, i32
  }
}

</mosaic_0001>

<llo_original>
// kernel: tpu_custom_call.1
$region0: #{tpu_custom_call.1}
  #allocation0 [shape = 'u32[]', space=smem, size = 0x4, offset = 0x4, fixed_abs, tag = 'smem constant byte address 0x4 - core index']
  #allocation1 [shape = 'u32[144,128]{1,0:T(1,128)}', space=vmem, size = 0x12000, scoped, tag = 'internal scratch']
  %s0 = inlined_call_operand.hbm [shape: bf16[80,256], index: 0, kind: input, shape index: {}]
  %s1 = inlined_call_operand.hbm [shape: bf16[256,256], index: 1, kind: input, shape index: {}]
  %s2 = inlined_call_operand.vmem [shape: f32[2,128], index: 2, kind: input, shape index: {}]
  %s3 = inlined_call_operand.hbm [shape: bf16[128,256], index: 3, kind: input, shape index: {}]
  %s4 = inlined_call_operand.hbm [shape: bf16[128,256], index: 4, kind: input, shape index: {}]
  %s5 = inlined_call_operand.hbm [shape: f32[80,256], index: 5, kind: output, shape index: {}]
  %s6 = sld [smem:[#allocation0]]
  $region69: #{tpu_custom_call.1} parent=0
    _
  %s8 = ssub.s32 1, %s6
  %s9 = scalar_select 0, %s8, %s6
  $region1: #{tpu_custom_call.1} parent=0
    #allocation2 [shape = 'u8[40960]{0}', space=vmem, size = 0xa000, scoped, tag = 'input window, operand 0']
    #allocation3 [shape = 's32[2]{0}', space=sflag, size = 0x8, scoped, tag = 'scoped memory for tpu_custom_call.1']
    #allocation4 [shape = 's32[2]{0}', space=sflag, size = 0x8, scoped, tag = 'scoped memory for tpu_custom_call.1']
    #allocation5 [shape = 'u8[131072]{0}', space=vmem, size = 0x20000, scoped, tag = 'input window, operand 1, single buffered']
    #allocation6 [shape = 's32[1]{0}', space=sflag, size = 0x4, scoped, tag = 'scoped memory for tpu_custom_call.1']
    #allocation7 [shape = 'u8[65536]{0}', space=vmem, size = 0x10000, scoped, tag = 'input window, operand 3, single buffered']
    #allocation8 [shape = 'u8[65536]{0}', space=vmem, size = 0x10000, scoped, tag = 'input window, operand 4, single buffered']
    #allocation9 [shape = 's32[1]{0}', space=sflag, size = 0x4, scoped, tag = 'scoped memory for tpu_custom_call.1']
    #allocation10 [shape = 'u8[81920]{0}', space=vmem, size = 0x14000, scoped, tag = 'output window, operand 0']
    %10 = vsyncpa [#allocation3], 0
    %s11 = scalar_lea.sflag [#allocation3], 1
    %12 = vsyncpa %s11, 0
    %13 = vsyncpa [#allocation6], 0
    %14 = vsyncpa [#allocation9], 0
    %15 = vsyncpa [#allocation4], 0
    %s16 = scalar_lea.sflag [#allocation4], 1
    %17 = vsyncpa %s16, 0
    loop: start=0, step=1, limit=4
    $region2: #{tpu_custom_call.1} parent=1 // loop_pre_header
      _
    $region3: #{tpu_custom_call.1} parent=1 // loop_header
      %s19 = sphi 0, %s23
      %p20 = scmp.ge.s32.totalorder %s19, 4
      %s29 = sphi 0, %s31
      %s32 = sphi 0, %s29
      %s33 = sphi 0, %s32
      %s49 = sphi 0, %s33
      %s53 = sphi 0, %s53
      %s55 = sphi 0, %s53
      %s56 = sphi 0, %s55
      %s70 = sphi 0, %s56
      %s74 = sphi 0, %s74
      %s76 = sphi 0, %s74
      %s77 = sphi 0, %s76
      %s91 = sphi 0, %s77
      %s95 = sphi 0, %s95
      %s97 = sphi 0, %s95
      %s98 = sphi 0, %s97
      %s112 = sphi 0, %s98
      %s116 = sphi 0, %s116
      %s118 = sphi 0, %s116
      %s119 = sphi 0, %s118
      %s133 = sphi 0, %s119
      %s139 = sphi 0, %s141
      %s142 = sphi 0, %s139
      %s143 = sphi 0, %s142
      %s159 = sphi 0, %s143
    $region4: #{tpu_custom_call.1} parent=1 // loop_header_branch
      %22 = sbr.rel (%p20) target = $region8
    $region5: #{tpu_custom_call.1} parent=1 // loop_body
      %s24 = ssub.s32 %s19, 1
      %s25 = ssub.s32 %s19, 2
      %s26 = sadd.s32 %s19, 1
      %s27 = ssub.s32 %s19, %s26
      %p28 = scmp.eq.s32.totalorder %s27, 0
      %s30 = sadd.s32 %s29, 1
      %s31 = scalar_select %p28, %s29, %s30
      %p34 = pneg %p28
      %p35 = scmp.eq.s32.totalorder %s19, 1
      %p36 = por %p34, %p35
      %p37 = scmp.ne.s32.totalorder %s29, %s32
      %p38 = scmp.eq.s32.totalorder %s19, 0
      %p39 = por %p37, %p38
      %p40 = scmp.ne.s32.totalorder %s29, %s32
      %p41 = scmp.eq.s32.totalorder %s24, 1
      %p42 = por %p40, %p41
      %p43 = scmp.ne.s32.totalorder %s32, %s33
      %p44 = scmp.eq.s32.totalorder %s24, 0
      %p45 = por %p43, %p44
      %p46 = scmp.ne.s32.totalorder %s32, %s33
      %p47 = scmp.eq.s32.totalorder %s25, 1
      %p48 = por %p46, %p47
      %p50 = scmp.ne.s32.totalorder %s33, %s49
      %p51 = scmp.eq.s32.totalorder %s25, 0
      %p52 = por %p50, %p51
      %s54 = sadd.s32 %s53, 1
      %p57 = scmp.eq.s32.totalorder %s19, 1
      %p58 = scmp.ne.s32.totalorder %s53, %s55
      %p59 = scmp.eq.s32.totalorder %s19, 0
      %p60 = por %p58, %p59
      %p61 = scmp.ne.s32.totalorder %s53, %s55
      %p62 = scmp.eq.s32.totalorder %s24, 1
      %p63 = por %p61, %p62
      %p64 = scmp.ne.s32.totalorder %s55, %s56
      %p65 = scmp.eq.s32.totalorder %s24, 0
      %p66 = por %p64, %p65
      %p67 = scmp.ne.s32.totalorder %s55, %s56
      %p68 = scmp.eq.s32.totalorder %s25, 1
      %p69 = por %p67, %p68
      %p71 = scmp.ne.s32.totalorder %s56, %s70
      %p72 = scmp.eq.s32.totalorder %s25, 0
      %p73 = por %p71, %p72
      %s75 = sadd.s32 %s74, 1
      %p78 = scmp.eq.s32.totalorder %s19, 1
      %p79 = scmp.ne.s32.totalorder %s74, %s76
      %p80 = scmp.eq.s32.totalorder %s19, 0
      %p81 = por %p79, %p80
      %p82 = scmp.ne.s32.totalorder %s74, %s76
      %p83 = scmp.eq.s32.totalorder %s24, 1
      %p84 = por %p82, %p83
      %p85 = scmp.ne.s32.totalorder %s76, %s77
      %p86 = scmp.eq.s32.totalorder %s24, 0
      %p87 = por %p85, %p86
      %p88 = scmp.ne.s32.totalorder %s76, %s77
      %p89 = scmp.eq.s32.totalorder %s25, 1
      %p90 = por %p88, %p89
      %p92 = scmp.ne.s32.totalorder %s77, %s91
      %p93 = scmp.eq.s32.totalorder %s25, 0
      %p94 = por %p92, %p93
      %s96 = sadd.s32 %s95, 1
      %p99 = scmp.eq.s32.totalorder %s19, 1
      %p100 = scmp.ne.s32.totalorder %s95, %s97
      %p101 = scmp.eq.s32.totalorder %s19, 0
      %p102 = por %p100, %p101
      %p103 = scmp.ne.s32.totalorder %s95, %s97
      %p104 = scmp.eq.s32.totalorder %s24, 1
      %p105 = por %p103, %p104
      %p106 = scmp.ne.s32.totalorder %s97, %s98
      %p107 = scmp.eq.s32.totalorder %s24, 0
      %p108 = por %p106, %p107
      %p109 = scmp.ne.s32.totalorder %s97, %s98
      %p110 = scmp.eq.s32.totalorder %s25, 1
      %p111 = por %p109, %p110
      %p113 = scmp.ne.s32.totalorder %s98, %s112
      %p114 = scmp.eq.s32.totalorder %s25, 0
      %p115 = por %p113, %p114
      %s117 = sadd.s32 %s116, 1
      %p120 = scmp.eq.s32.totalorder %s19, 1
      %p121 = scmp.ne.s32.totalorder %s116, %s118
      %p122 = scmp.eq.s32.totalorder %s19, 0
      %p123 = por %p121, %p122
      %p124 = scmp.ne.s32.totalorder %s116, %s118
      %p125 = scmp.eq.s32.totalorder %s24, 1
      %p126 = por %p124, %p125
      %p127 = scmp.ne.s32.totalorder %s118, %s119
      %p128 = scmp.eq.s32.totalorder %s24, 0
      %p129 = por %p127, %p128
      %p130 = scmp.ne.s32.totalorder %s118, %s119
      %p131 = scmp.eq.s32.totalorder %s25, 1
      %p132 = por %p130, %p131
      %p134 = scmp.ne.s32.totalorder %s119, %s133
      %p135 = scmp.eq.s32.totalorder %s25, 0
      %p136 = por %p134, %p135
      %s137 = ssub.s32 %s19, %s26
      %p138 = scmp.eq.s32.totalorder %s137, 0
      %s140 = sadd.s32 %s139, 1
      %s141 = scalar_select %p138, %s139, %s140
      %p144 = pneg %p138
      %p145 = scmp.eq.s32.totalorder %s19, 1
      %p146 = por %p144, %p145
      %p147 = scmp.ne.s32.totalorder %s139, %s142
      %p148 = scmp.eq.s32.totalorder %s19, 0
      %p149 = por %p147, %p148
      %p150 = scmp.ne.s32.totalorder %s139, %s142
      %p151 = scmp.eq.s32.totalorder %s24, 1
      %p152 = por %p150, %p151
      %p153 = scmp.ne.s32.totalorder %s142, %s143
      %p154 = scmp.eq.s32.totalorder %s24, 0
      %p155 = por %p153, %p154
      %p156 = scmp.ne.s32.totalorder %s142, %s143
      %p157 = scmp.eq.s32.totalorder %s25, 1
      %p158 = por %p156, %p157
      %p160 = scmp.ne.s32.totalorder %s143, %s159
      %p161 = scmp.eq.s32.totalorder %s25, 0
      %p162 = por %p160, %p161
      %p163 = scmp.le.s32.totalorder 1, %s19
      %p164 = scmp.lt.s32.totalorder %s19, 3
      %p165 = pnand %p163, %p164
      %p166 = pneg %p165
      // Predicated region
      $region9: #{tpu_custom_call.1} parent=5 // pred_check
        _
      $region10: #{tpu_custom_call.1} parent=5 // pred_check_branch
        %168 = sbr.rel (%p165) target = $region12
      $region11: #{tpu_custom_call.1} parent=5 // pred_region
        %s169 = ssub.s32 %s19, 1
        // Predicated region
        $region13: #{tpu_custom_call.1} parent=11 // pred_check
          %p170 = pneg %p66
        $region14: #{tpu_custom_call.1} parent=11 // pred_check_branch
          %172 = sbr.rel (%p170) target = $region16
        $region15: #{tpu_custom_call.1} parent=11 // pred_region
          %s174 = ssub.s32 4096, 4096
          %175 = vsyncadd [#allocation6], %s174
          %s176 = sshll.u32 [#allocation5], 4
          %s177 = int_to_ptr.vmem [resolvable:$true] %s176
          %182 = dma.hbm_to_vmem [thread:$0]  %s1, 4096, %s177, [#allocation6], 128, 128, 8
        $region16: #{tpu_custom_call.1} parent=11 // pred_fallthru
          _
        // Predicated region
        $region17: #{tpu_custom_call.1} parent=11 // pred_check
          %p183 = pneg %p87
        $region18: #{tpu_custom_call.1} parent=11 // pred_check_branch
          %185 = sbr.rel (%p183) target = $region20
        $region19: #{tpu_custom_call.1} parent=11 // pred_region
          _
        $region20: #{tpu_custom_call.1} parent=11 // pred_fallthru
          _
        // Predicated region
        $region21: #{tpu_custom_call.1} parent=11 // pred_check
          %p186 = pneg %p108
        $region22: #{tpu_custom_call.1} parent=11 // pred_check_branch
          %188 = sbr.rel (%p186) target = $region24
        $region23: #{tpu_custom_call.1} parent=11 // pred_region
          %s190 = ssub.s32 2048, 2048
          %191 = vsyncadd [#allocation6], %s190
          %s192 = sshll.u32 [#allocation7], 4
          %s193 = int_to_ptr.vmem [resolvable:$true] %s192
          %198 = dma.hbm_to_vmem [thread:$0]  %s3, 2048, %s193, [#allocation6], 128, 128, 8
        $region24: #{tpu_custom_call.1} parent=11 // pred_fallthru
          _
        // Predicated region
        $region25: #{tpu_custom_call.1} parent=11 // pred_check
          %p199 = pneg %p129
        $region26: #{tpu_custom_call.1} parent=11 // pred_check_branch
          %201 = sbr.rel (%p199) target = $region28
        $region27: #{tpu_custom_call.1} parent=11 // pred_region
          %s203 = ssub.s32 2048, 2048
          %204 = vsyncadd [#allocation9], %s203
          %s205 = sshll.u32 [#allocation8], 4
          %s206 = int_to_ptr.vmem [resolvable:$true] %s205
          %211 = dma.hbm_to_vmem [thread:$0]  %s4, 2048, %s206, [#allocation9], 128, 128, 8
        $region28: #{tpu_custom_call.1} parent=11 // pred_fallthru
          _
      $region12: #{tpu_custom_call.1} parent=5 // pred_fallthru
        _
      %p212 = scmp.lt.s32.totalorder %s19, 2
      // Predicated region
      $region29: #{tpu_custom_call.1} parent=5 // pred_check
        %p213 = pneg %p212
      $region30: #{tpu_custom_call.1} parent=5 // pred_check_branch
        %215 = sbr.rel (%p213) target = $region32
      $region31: #{tpu_custom_call.1} parent=5 // pred_region
        // Predicated region
        $region33: #{tpu_custom_call.1} parent=31 // pred_check
          %p216 = pneg %p39
        $region34: #{tpu_custom_call.1} parent=31 // pred_check_branch
          %218 = sbr.rel (%p216) target = $region36
        $region35: #{tpu_custom_call.1} parent=31 // pred_region
          %s219 = sand.u32 %s29, 1
          %s220 = scalar_lea.sflag [#allocation3], %s219
          %s221 = sand.u32 %s29, 1
          %s222 = smul.addr %s221, 40
          %s223 = scalar_lea.vmem [#allocation2], %s222
          %s224 = smul.u32 5, %s19
          %s226 = ssub.s32 640, 640
          %227 = vsyncadd %s220, %s226
          %s228 = smul.addr %s224, 2
          %s229 = smul.addr %s228, 64
          %s230 = scalar_lea.hbm %s0, %s229
          %s231 = sshll.u32 %s223, 4
          %s232 = int_to_ptr.vmem [resolvable:$true] %s231
          %237 = dma.hbm_to_vmem [thread:$0]  %s230, 640, %s232, %s220, 128, 128, 8
        $region36: #{tpu_custom_call.1} parent=31 // pred_fallthru
          _
      $region32: #{tpu_custom_call.1} parent=5 // pred_fallthru
        _
      %p238 = scmp.le.s32.totalorder 1, %s19
      %p239 = scmp.lt.s32.totalorder %s19, 3
      %p240 = pnand %p238, %p239
      %p241 = pneg %p240
      // Predicated region
      $region37: #{tpu_custom_call.1} parent=5 // pred_check
        _
      $region38: #{tpu_custom_call.1} parent=5 // pred_check_branch
        %243 = sbr.rel (%p240) target = $region40
      $region39: #{tpu_custom_call.1} parent=5 // pred_region
        %s244 = ssub.s32 %s19, 1
        %s245 = sand.u32 %s32, 1
        %s246 = scalar_lea.sflag [#allocation3], %s245
        %s247 = sand.u32 %s32, 1
        %s248 = smul.addr %s247, 40
        %s249 = scalar_lea.vmem [#allocation2], %s248
        // Predicated region
        $region41: #{tpu_custom_call.1} parent=39 // pred_check
          %p250 = pneg %p45
        $region42: #{tpu_custom_call.1} parent=39 // pred_check_branch
          %252 = sbr.rel (%p250) target = $region44
        $region43: #{tpu_custom_call.1} parent=39 // pred_region
          %253 = dma.done %s246, 640
        $region44: #{tpu_custom_call.1} parent=39 // pred_fallthru
          _
        // Predicated region
        $region45: #{tpu_custom_call.1} parent=39 // pred_check
          %p254 = pneg %p66
        $region46: #{tpu_custom_call.1} parent=39 // pred_check_branch
          %256 = sbr.rel (%p254) target = $region48
        $region47: #{tpu_custom_call.1} parent=39 // pred_region
          %257 = dma.done [#allocation6], 4096
        $region48: #{tpu_custom_call.1} parent=39 // pred_fallthru
          _
        // Predicated region
        $region49: #{tpu_custom_call.1} parent=39 // pred_check
          %p258 = pneg %p108
        $region50: #{tpu_custom_call.1} parent=39 // pred_check_branch
          %260 = sbr.rel (%p258) target = $region52
        $region51: #{tpu_custom_call.1} parent=39 // pred_region
          %261 = dma.done [#allocation6], 2048
        $region52: #{tpu_custom_call.1} parent=39 // pred_fallthru
          _
        // Predicated region
        $region53: #{tpu_custom_call.1} parent=39 // pred_check
          %p262 = pneg %p129
        $region54: #{tpu_custom_call.1} parent=39 // pred_check_branch
          %264 = sbr.rel (%p262) target = $region56
        $region55: #{tpu_custom_call.1} parent=39 // pred_region
          %265 = dma.done [#allocation9], 2048
        $region56: #{tpu_custom_call.1} parent=39 // pred_fallthru
          _
        %s266 = sand.u32 %s32, 1
        %s267 = scalar_lea.sflag [#allocation3], %s266
        %s268 = sand.u32 %s32, 1
        %s269 = smul.addr %s268, 40
        %s270 = scalar_lea.vmem [#allocation2], %s269
        %p271 = pneg %p45
        %p272 = pneg %p42
        %p273 = pneg %p66
        %p274 = pneg %p63
        %p275 = pneg %p87
        %p276 = pneg %p84
        %p277 = pneg %p108
        %p278 = pneg %p105
        %p279 = pneg %p129
        %p280 = pneg %p126
        %p281 = pneg %p155
        %p282 = pneg %p152
        %s283 = sand.u32 %s142, 1
        %s284 = scalar_lea.sflag [#allocation4], %s283
        %s285 = sand.u32 %s142, 1
        %s286 = smul.addr %s285, 80
        %s287 = scalar_lea.vmem [#allocation10], %s286
        %s288 = smul.u32 5, %s24
        %s289 = smul.u32 5, %s24
        %v291 = vld [vmem:[%s249] sm:$0xff]
        %v292 = vld [vmem:[%s249 + $0x8] sm:$0xff]
        %v293 = vld [vmem:[%s249 + $0x10] sm:$0xff]
        %v294 = vld [vmem:[%s249 + $0x18] sm:$0xff]
        %v295 = vld [vmem:[%s249 + $0x20] sm:$0xff]
        %v296 = vld [vmem:[#allocation5] sm:$0xff]
        %v297 = vld [vmem:[#allocation5 + $0x8] sm:$0xff]
        %v298 = vld [vmem:[#allocation5 + $0x10] sm:$0xff]
        %v299 = vld [vmem:[#allocation5 + $0x18] sm:$0xff]
        %v300 = vld [vmem:[#allocation5 + $0x20] sm:$0xff]
        %v301 = vld [vmem:[#allocation5 + $0x28] sm:$0xff]
        %v302 = vld [vmem:[#allocation5 + $0x30] sm:$0xff]
        %v303 = vld [vmem:[#allocation5 + $0x38] sm:$0xff]
        %v304 = vld [vmem:[#allocation5 + $0x40] sm:$0xff]
        %v305 = vld [vmem:[#allocation5 + $0x48] sm:$0xff]
        %v306 = vld [vmem:[#allocation5 + $0x50] sm:$0xff]
        %v307 = vld [vmem:[#allocation5 + $0x58] sm:$0xff]
        %v308 = vld [vmem:[#allocation5 + $0x60] sm:$0xff]
        %v309 = vld [vmem:[#allocation5 + $0x68] sm:$0xff]
        %v310 = vld [vmem:[#allocation5 + $0x70] sm:$0xff]
        %v311 = vld [vmem:[#allocation5 + $0x78] sm:$0xff]
        %v312 = vld [vmem:[#allocation5 + $0x80] sm:$0xff]
        %v313 = vld [vmem:[#allocation5 + $0x88] sm:$0xff]
        %v314 = vld [vmem:[#allocation5 + $0x90] sm:$0xff]
        %v315 = vld [vmem:[#allocation5 + $0x98] sm:$0xff]
        %v316 = vld [vmem:[#allocation5 + $0xa0] sm:$0xff]
        %v317 = vld [vmem:[#allocation5 + $0xa8] sm:$0xff]
        %v318 = vld [vmem:[#allocation5 + $0xb0] sm:$0xff]
        %v319 = vld [vmem:[#allocation5 + $0xb8] sm:$0xff]
        %v320 = vld [vmem:[#allocation5 + $0xc0] sm:$0xff]
        %v321 = vld [vmem:[#allocation5 + $0xc8] sm:$0xff]
        %v322 = vld [vmem:[#allocation5 + $0xd0] sm:$0xff]
        %v323 = vld [vmem:[#allocation5 + $0xd8] sm:$0xff]
        %v324 = vld [vmem:[#allocation5 + $0xe0] sm:$0xff]
        %v325 = vld [vmem:[#allocation5 + $0xe8] sm:$0xff]
        %v326 = vld [vmem:[#allocation5 + $0xf0] sm:$0xff]
        %v327 = vld [vmem:[#allocation5 + $0xf8] sm:$0xff]
        %v333 = vunpack.c.l.b16 %v291
        %v334 = vunpack.c.h.b16 %v291
        %v335 = vunpack.c.l.b16 %v292
        %v336 = vunpack.c.h.b16 %v292
        %v337 = vunpack.c.l.b16 %v293
        %v338 = vunpack.c.h.b16 %v293
        %v339 = vunpack.c.l.b16 %v294
        %v340 = vunpack.c.h.b16 %v294
        %v341 = vunpack.c.l.b16 %v295
        %v342 = vunpack.c.h.b16 %v295
        %v343 = vpack.c.b16 %v335, %v333
        %v344 = vpack.c.b16 %v336, %v334
        %v345 = vpack.c.b16 %v339, %v337
        %v346 = vpack.c.b16 %v340, %v338
        %v347 = vpack.c.b16 %v341, %v341
        %v348 = vpack.c.b16 %v342, %v342
        %v387 = vunpack.c.l.b16 %v296
        %v388 = vunpack.c.h.b16 %v296
        %v389 = vunpack.c.l.b16 %v297
        %v390 = vunpack.c.h.b16 %v297
        %v391 = vunpack.c.l.b16 %v298
        %v392 = vunpack.c.h.b16 %v298
        %v393 = vunpack.c.l.b16 %v299
        %v394 = vunpack.c.h.b16 %v299
        %v395 = vunpack.c.l.b16 %v300
        %v396 = vunpack.c.h.b16 %v300
        %v397 = vunpack.c.l.b16 %v301
        %v398 = vunpack.c.h.b16 %v301
        %v399 = vunpack.c.l.b16 %v302
        %v400 = vunpack.c.h.b16 %v302
        %v401 = vunpack.c.l.b16 %v303
        %v402 = vunpack.c.h.b16 %v303
        %v403 = vunpack.c.l.b16 %v304
        %v404 = vunpack.c.h.b16 %v304
        %v405 = vunpack.c.l.b16 %v305
        %v406 = vunpack.c.h.b16 %v305
        %v407 = vunpack.c.l.b16 %v306
        %v408 = vunpack.c.h.b16 %v306
        %v409 = vunpack.c.l.b16 %v307
        %v410 = vunpack.c.h.b16 %v307
        %v411 = vunpack.c.l.b16 %v308
        %v412 = vunpack.c.h.b16 %v308
        %v413 = vunpack.c.l.b16 %v309
        %v414 = vunpack.c.h.b16 %v309
        %v415 = vunpack.c.l.b16 %v310
        %v416 = vunpack.c.h.b16 %v310
        %v417 = vunpack.c.l.b16 %v311
        %v418 = vunpack.c.h.b16 %v311
        %v419 = vunpack.c.l.b16 %v312
        %v420 = vunpack.c.h.b16 %v312
        %v421 = vunpack.c.l.b16 %v313
        %v422 = vunpack.c.h.b16 %v313
        %v423 = vunpack.c.l.b16 %v314
        %v424 = vunpack.c.h.b16 %v314
        %v425 = vunpack.c.l.b16 %v315
        %v426 = vunpack.c.h.b16 %v315
        %v427 = vunpack.c.l.b16 %v316
        %v428 = vunpack.c.h.b16 %v316
        %v429 = vunpack.c.l.b16 %v317
        %v430 = vunpack.c.h.b16 %v317
        %v431 = vunpack.c.l.b16 %v318
        %v432 = vunpack.c.h.b16 %v318
        %v433 = vunpack.c.l.b16 %v319
        %v434 = vunpack.c.h.b16 %v319
        %v435 = vunpack.c.l.b16 %v320
        %v436 = vunpack.c.h.b16 %v320
        %v437 = vunpack.c.l.b16 %v321
        %v438 = vunpack.c.h.b16 %v321
        %v439 = vunpack.c.l.b16 %v322
        %v440 = vunpack.c.h.b16 %v322
        %v441 = vunpack.c.l.b16 %v323
        %v442 = vunpack.c.h.b16 %v323
        %v443 = vunpack.c.l.b16 %v324
        %v444 = vunpack.c.h.b16 %v324
        %v445 = vunpack.c.l.b16 %v325
        %v446 = vunpack.c.h.b16 %v325
        %v447 = vunpack.c.l.b16 %v326
        %v448 = vunpack.c.h.b16 %v326
        %v449 = vunpack.c.l.b16 %v327
        %v450 = vunpack.c.h.b16 %v327
        %v451 = vpack.c.b16 %v389, %v387
        %v452 = vpack.c.b16 %v390, %v388
        %v453 = vpack.c.b16 %v393, %v391
        %v454 = vpack.c.b16 %v394, %v392
        %v455 = vpack.c.b16 %v397, %v395
        %v456 = vpack.c.b16 %v398, %v396
        %v457 = vpack.c.b16 %v401, %v399
        %v458 = vpack.c.b16 %v402, %v400
        %v459 = vpack.c.b16 %v405, %v403
        %v460 = vpack.c.b16 %v406, %v404
        %v461 = vpack.c.b16 %v409, %v407
        %v462 = vpack.c.b16 %v410, %v408
        %v463 = vpack.c.b16 %v413, %v411
        %v464 = vpack.c.b16 %v414, %v412
        %v465 = vpack.c.b16 %v417, %v415
        %v466 = vpack.c.b16 %v418, %v416
        %v467 = vpack.c.b16 %v421, %v419
        %v468 = vpack.c.b16 %v422, %v420
        %v469 = vpack.c.b16 %v425, %v423
        %v470 = vpack.c.b16 %v426, %v424
        %v471 = vpack.c.b16 %v429, %v427
        %v472 = vpack.c.b16 %v430, %v428
        %v473 = vpack.c.b16 %v433, %v431
        %v474 = vpack.c.b16 %v434, %v432
        %v475 = vpack.c.b16 %v437, %v435
        %v476 = vpack.c.b16 %v438, %v436
        %v477 = vpack.c.b16 %v441, %v439
        %v478 = vpack.c.b16 %v442, %v440
        %v479 = vpack.c.b16 %v445, %v443
        %v480 = vpack.c.b16 %v446, %v444
        %v481 = vpack.c.b16 %v449, %v447
        %v482 = vpack.c.b16 %v450, %v448
        %515 = vmatprep.subr.bf16.mxu0 %v466
        %516 = vmatpush1.bf16.msra.mxu0 %v465
        %517 = vmatprep.subr.bf16.mxu0 %v464
        %518 = vmatpush1.bf16.msra.mxu0 %v463
        %519 = vmatprep.subr.bf16.mxu0 %v462
        %520 = vmatpush1.bf16.msra.mxu0 %v461
        %521 = vmatprep.subr.bf16.mxu0 %v460
        %522 = vmatpush1.bf16.msra.mxu0 %v459
        %523 = vmatprep.subr.bf16.mxu0 %v458
        %524 = vmatpush1.bf16.msra.mxu0 %v457
        %525 = vmatprep.subr.bf16.mxu0 %v456
        %526 = vmatpush1.bf16.msra.mxu0 %v455
        %527 = vmatprep.subr.bf16.mxu0 %v454
        %528 = vmatpush1.bf16.msra.mxu0 %v453
        %529 = vmatprep.subr.bf16.mxu0 %v452
        %530 = vmatpush1.bf16.msra.mxu0 %v451
        %531 = vmatprep.subr.bf16.mxu0 %v482
        %532 = vmatpush2.bf16.msra.mxu0 %v481
        %533 = vmatprep.subr.bf16.mxu0 %v480
        %534 = vmatpush2.bf16.msra.mxu0 %v479
        %535 = vmatprep.subr.bf16.mxu0 %v478
        %536 = vmatpush2.bf16.msra.mxu0 %v477
        %537 = vmatprep.subr.bf16.mxu0 %v476
        %538 = vmatpush2.bf16.msra.mxu0 %v475
        %539 = vmatprep.subr.bf16.mxu0 %v474
        %540 = vmatpush2.bf16.msra.mxu0 %v473
        %541 = vmatprep.subr.bf16.mxu0 %v472
        %542 = vmatpush2.bf16.msra.mxu0 %v471
        %543 = vmatprep.subr.bf16.mxu0 %v470
        %544 = vmatpush2.bf16.msra.mxu0 %v469
        %545 = vmatprep.subr.bf16.mxu0 %v468
        %546 = vmatpush2.bf16.msra.mxu0 %v467
        %547 = vmatprep.mubr.bf16.mxu0 %v344
        %548 = vmatmul.mubr.bf16.gmra.mxu0 %v343
        %v549 = vpop.f32.mrf.mxu0
        %v550 = vadd.f32 0.0, %v549
        %v551 = vpop.f32.mrf.mxu0
        %v552 = vadd.f32 0.0, %v551
        %v553 = vpop.f32.mrf.mxu0
        %v554 = vadd.f32 0.0, %v553
        %v555 = vpop.f32.mrf.mxu0
        %v556 = vadd.f32 0.0, %v555
        %557 = vmatprep.mubr.bf16.mxu0 %v346
        %558 = vmatmul.mubr.bf16.gmra.mxu0 %v345
        %v559 = vpop.f32.mrf.mxu0
        %v560 = vadd.f32 0.0, %v559
        %v561 = vpop.f32.mrf.mxu0
        %v562 = vadd.f32 0.0, %v561
        %v563 = vpop.f32.mrf.mxu0
        %v564 = vadd.f32 0.0, %v563
        %v565 = vpop.f32.mrf.mxu0
        %v566 = vadd.f32 0.0, %v565
        %567 = vmatprep.mubr.bf16.mxu0 %v348
        %568 = vmatmul.mubr.bf16.gmra.mxu0 %v347
        %v569 = vpop.f32.mrf.mxu0
        %v570 = vadd.f32 0.0, %v569
        %v571 = vpop.f32.mrf.mxu0
        %v572 = vadd.f32 0.0, %v571
        %v573 = vpop.f32.mrf.mxu0
        %v574 = vpop.f32.mrf.mxu0
        %575 = vdwg.mxu0
        %v576 = vld [vmem:[%s2] sm:$0x3]
        %v577 = vlaneseq
        %v578 = vand.u32 %v577, 127
        %vm579 = vcmp.eq.s32.totalorder %v578, 0
        %v580 = vmul.f32 %v550, %v550
        %v581 = vmul.f32 %v554, %v554
        %v582 = vmul.f32 %v560, %v560
        %v583 = vmul.f32 %v564, %v564
        %v584 = vmul.f32 %v570, %v570
        %v585 = vmul.f32 %v552, %v552
        %v586 = vmul.f32 %v556, %v556
        %v587 = vmul.f32 %v562, %v562
        %v588 = vmul.f32 %v566, %v566
        %v589 = vmul.f32 %v572, %v572
        %v590 = vadd.f32 %v580, %v585
        %v591 = vadd.f32 %v581, %v586
        %v592 = vadd.f32 %v582, %v587
        %v593 = vadd.f32 %v583, %v588
        %v594 = vadd.f32 %v584, %v589
        %v595 = vsel %vm579, 1, 0
        %vm596 = vcmp.eq.s32.totalorder %v595, 1
        %v597 = vsel %vm596, %v580, %v590
        %v598 = vsel %vm596, %v581, %v591
        %v599 = vsel %vm596, %v582, %v592
        %v600 = vsel %vm596, %v583, %v593
        %v601 = vsel %vm596, %v584, %v594
        %v602 = vsel %vm596, %v585, %v590
        %v603 = vsel %vm596, %v586, %v591
        %v604 = vsel %vm596, %v587, %v592
        %v605 = vsel %vm596, %v588, %v593
        %v606 = vsel %vm596, %v589, %v594
        %v607 = vmax.f32 %v597, 1e-30
        %v608 = vmax.f32 %v598, 1e-30
        %v609 = vmax.f32 %v599, 1e-30
        %v610 = vmax.f32 %v600, 1e-30
        %v611 = vmax.f32 %v601, 1e-30
        %v612 = vrsqrt.pop %v607
        %v613 = vrsqrt.pop %v608
        %v614 = vrsqrt.pop %v609
        %v615 = vrsqrt.pop %v610
        %v616 = vrsqrt.pop %v611
        %v617 = vlaneseq
        %v618 = vshrl.u32 %v617, 7
        %v619 = vsub.s32 0, %v618
        %v620 = vrot.slane %v576, %v619
        %v621 = vmul.f32 %v620, %v612
        %v622 = vmul.f32 %v620, %v613
        %v623 = vmul.f32 %v620, %v614
        %v624 = vmul.f32 %v620, %v615
        %v625 = vmul.f32 %v620, %v616
        %v626 = vsub.f32 1.0, %v621
        %v627 = vsub.f32 1.0, %v622
        %v628 = vsub.f32 1.0, %v623
        %v629 = vsub.f32 1.0, %v624
        %v630 = vsub.f32 1.0, %v625
        %v631 = vmax.f32 %v626, 0.0
        %v632 = vmax.f32 %v627, 0.0
        %v633 = vmax.f32 %v628, 0.0
        %v634 = vmax.f32 %v629, 0.0
        %v635 = vmax.f32 %v630, 0.0
        %v636 = vmax.f32 %v602, 1e-30
        %v637 = vmax.f32 %v603, 1e-30
        %v638 = vmax.f32 %v604, 1e-30
        %v639 = vmax.f32 %v605, 1e-30
        %v640 = vmax.f32 %v606, 1e-30
        %v641 = vrsqrt.pop %v636
        %v642 = vrsqrt.pop %v637
        %v643 = vrsqrt.pop %v638
        %v644 = vrsqrt.pop %v639
        %v645 = vrsqrt.pop %v640
        %v646 = vlaneseq
        %v647 = vshrl.u32 %v646, 7
        %v648 = vsub.s32 1, %v647
        %v649 = vrot.slane %v576, %v648
        %v650 = vmul.f32 %v649, %v641
        %v651 = vmul.f32 %v649, %v642
        %v652 = vmul.f32 %v649, %v643
        %v653 = vmul.f32 %v649, %v644
        %v654 = vmul.f32 %v649, %v645
        %v655 = vsub.f32 1.0, %v650
        %v656 = vsub.f32 1.0, %v651
        %v657 = vsub.f32 1.0, %v652
        %v658 = vsub.f32 1.0, %v653
        %v659 = vsub.f32 1.0, %v654
        %v660 = vmax.f32 %v655, 0.0
        %v661 = vmax.f32 %v656, 0.0
        %v662 = vmax.f32 %v657, 0.0
        %v663 = vmax.f32 %v658, 0.0
        %v664 = vmax.f32 %v659, 0.0
        %v665 = vmul.f32 %v550, %v631
        %v666 = vmul.f32 %v554, %v632
        %v667 = vmul.f32 %v560, %v633
        %v668 = vmul.f32 %v564, %v634
        %v669 = vmul.f32 %v570, %v635
        %v670 = vpack.c.bf16 %v666, %v665
        %v671 = vpack.c.bf16 %v668, %v667
        %v672 = vpack.c.bf16 %v669, %v669
        %v673 = vmul.f32 %v552, %v660
        %v674 = vmul.f32 %v556, %v661
        %v675 = vmul.f32 %v562, %v662
        %v676 = vmul.f32 %v566, %v663
        %v677 = vmul.f32 %v572, %v664
        %v678 = vpack.c.bf16 %v674, %v673
        %v679 = vpack.c.bf16 %v676, %v675
        %v680 = vpack.c.bf16 %v677, %v677
        %v681 = vld [vmem:[#allocation7] sm:$0xff]
        %v682 = vld [vmem:[#allocation7 + $0x8] sm:$0xff]
        %v683 = vld [vmem:[#allocation7 + $0x10] sm:$0xff]
        %v684 = vld [vmem:[#allocation7 + $0x18] sm:$0xff]
        %v685 = vld [vmem:[#allocation7 + $0x20] sm:$0xff]
        %v686 = vld [vmem:[#allocation7 + $0x28] sm:$0xff]
        %v687 = vld [vmem:[#allocation7 + $0x30] sm:$0xff]
        %v688 = vld [vmem:[#allocation7 + $0x38] sm:$0xff]
        %v689 = vld [vmem:[#allocation7 + $0x40] sm:$0xff]
        %v690 = vld [vmem:[#allocation7 + $0x48] sm:$0xff]
        %v691 = vld [vmem:[#allocation7 + $0x50] sm:$0xff]
        %v692 = vld [vmem:[#allocation7 + $0x58] sm:$0xff]
        %v693 = vld [vmem:[#allocation7 + $0x60] sm:$0xff]
        %v694 = vld [vmem:[#allocation7 + $0x68] sm:$0xff]
        %v695 = vld [vmem:[#allocation7 + $0x70] sm:$0xff]
        %v696 = vld [vmem:[#allocation7 + $0x78] sm:$0xff]
        %v697 = vld [vmem:[#allocation8] sm:$0xff]
        %v698 = vld [vmem:[#allocation8 + $0x8] sm:$0xff]
        %v699 = vld [vmem:[#allocation8 + $0x10] sm:$0xff]
        %v700 = vld [vmem:[#allocation8 + $0x18] sm:$0xff]
        %v701 = vld [vmem:[#allocation8 + $0x20] sm:$0xff]
        %v702 = vld [vmem:[#allocation8 + $0x28] sm:$0xff]
        %v703 = vld [vmem:[#allocation8 + $0x30] sm:$0xff]
        %v704 = vld [vmem:[#allocation8 + $0x38] sm:$0xff]
        %v705 = vld [vmem:[#allocation8 + $0x40] sm:$0xff]
        %v706 = vld [vmem:[#allocation8 + $0x48] sm:$0xff]
        %v707 = vld [vmem:[#allocation8 + $0x50] sm:$0xff]
        %v708 = vld [vmem:[#allocation8 + $0x58] sm:$0xff]
        %v709 = vld [vmem:[#allocation8 + $0x60] sm:$0xff]
        %v710 = vld [vmem:[#allocation8 + $0x68] sm:$0xff]
        %v711 = vld [vmem:[#allocation8 + $0x70] sm:$0xff]
        %v712 = vld [vmem:[#allocation8 + $0x78] sm:$0xff]
        %v729 = vunpack.c.l.b16 %v697
        %v730 = vunpack.c.h.b16 %v697
        %v731 = vunpack.c.l.b16 %v698
        %v732 = vunpack.c.h.b16 %v698
        %v733 = vunpack.c.l.b16 %v699
        %v734 = vunpack.c.h.b16 %v699
        %v735 = vunpack.c.l.b16 %v700
        %v736 = vunpack.c.h.b16 %v700
        %v737 = vunpack.c.l.b16 %v701
        %v738 = vunpack.c.h.b16 %v701
        %v739 = vunpack.c.l.b16 %v702
        %v740 = vunpack.c.h.b16 %v702
        %v741 = vunpack.c.l.b16 %v703
        %v742 = vunpack.c.h.b16 %v703
        %v743 = vunpack.c.l.b16 %v704
        %v744 = vunpack.c.h.b16 %v704
        %v745 = vunpack.c.l.b16 %v705
        %v746 = vunpack.c.h.b16 %v705
        %v747 = vunpack.c.l.b16 %v706
        %v748 = vunpack.c.h.b16 %v706
        %v749 = vunpack.c.l.b16 %v707
        %v750 = vunpack.c.h.b16 %v707
        %v751 = vunpack.c.l.b16 %v708
        %v752 = vunpack.c.h.b16 %v708
        %v753 = vunpack.c.l.b16 %v709
        %v754 = vunpack.c.h.b16 %v709
        %v755 = vunpack.c.l.b16 %v710
        %v756 = vunpack.c.h.b16 %v710
        %v757 = vunpack.c.l.b16 %v711
        %v758 = vunpack.c.h.b16 %v711
        %v759 = vunpack.c.l.b16 %v712
        %v760 = vunpack.c.h.b16 %v712
        %v761 = vpack.c.b16 %v731, %v729
        %v762 = vpack.c.b16 %v732, %v730
        %v763 = vpack.c.b16 %v735, %v733
        %v764 = vpack.c.b16 %v736, %v734
        %v765 = vpack.c.b16 %v739, %v737
        %v766 = vpack.c.b16 %v740, %v738
        %v767 = vpack.c.b16 %v743, %v741
        %v768 = vpack.c.b16 %v744, %v742
        %v769 = vpack.c.b16 %v747, %v745
        %v770 = vpack.c.b16 %v748, %v746
        %v771 = vpack.c.b16 %v751, %v749
        %v772 = vpack.c.b16 %v752, %v750
        %v773 = vpack.c.b16 %v755, %v753
        %v774 = vpack.c.b16 %v756, %v754
        %v775 = vpack.c.b16 %v759, %v757
        %v776 = vpack.c.b16 %v760, %v758
        %793 = vmatprep.subr.bf16.mxu0 %v776
        %794 = vmatpush1.bf16.msra.mxu0 %v775
        %795 = vmatprep.subr.bf16.mxu0 %v774
        %796 = vmatpush1.bf16.msra.mxu0 %v773
        %797 = vmatprep.subr.bf16.mxu0 %v772
        %798 = vmatpush1.bf16.msra.mxu0 %v771
        %799 = vmatprep.subr.bf16.mxu0 %v770
        %800 = vmatpush1.bf16.msra.mxu0 %v769
        %801 = vmatprep.subr.bf16.mxu0 %v768
        %802 = vmatpush1.bf16.msra.mxu0 %v767
        %803 = vmatprep.subr.bf16.mxu0 %v766
        %804 = vmatpush1.bf16.msra.mxu0 %v765
        %805 = vmatprep.subr.bf16.mxu0 %v764
        %806 = vmatpush1.bf16.msra.mxu0 %v763
        %807 = vmatprep.subr.bf16.mxu0 %v762
        %808 = vmatpush1.bf16.msra.mxu0 %v761
        %809 = vmatprep.subr.bf16.mxu0 0
        %810 = vmatpush2.bf16.msra.mxu0 0
        %811 = vmatprep.subr.bf16.mxu0 0
        %812 = vmatpush2.bf16.msra.mxu0 0
        %813 = vmatprep.subr.bf16.mxu0 0
        %814 = vmatpush2.bf16.msra.mxu0 0
        %815 = vmatprep.subr.bf16.mxu0 0
        %816 = vmatpush2.bf16.msra.mxu0 0
        %817 = vmatprep.subr.bf16.mxu0 0
        %818 = vmatpush2.bf16.msra.mxu0 0
        %819 = vmatprep.subr.bf16.mxu0 0
        %820 = vmatpush2.bf16.msra.mxu0 0
        %821 = vmatprep.subr.bf16.mxu0 0
        %822 = vmatpush2.bf16.msra.mxu0 0
        %823 = vmatprep.subr.bf16.mxu0 0
        %824 = vmatpush2.bf16.msra.mxu0 0
        %825 = vmatprep.mubr.bf16.mxu0 0
        %826 = vmatmul.mubr.bf16.gmra.mxu0 %v678
        %v827 = vpop.f32.mrf.mxu0
        %v828 = vadd.f32 0.0, %v827
        %v829 = vpop.f32.mrf.mxu0
        %v830 = vadd.f32 0.0, %v829
        %v831 = vpop.f32.mrf.mxu0
        %v832 = vadd.f32 0.0, %v831
        %v833 = vpop.f32.mrf.mxu0
        %v834 = vadd.f32 0.0, %v833
        %835 = vmatprep.mubr.bf16.mxu0 0
        %836 = vmatmul.mubr.bf16.gmra.mxu0 %v679
        %v837 = vpop.f32.mrf.mxu0
        %v838 = vadd.f32 0.0, %v837
        %v839 = vpop.f32.mrf.mxu0
        %v840 = vadd.f32 0.0, %v839
        %v841 = vpop.f32.mrf.mxu0
        %v842 = vadd.f32 0.0, %v841
        %v843 = vpop.f32.mrf.mxu0
        %v844 = vadd.f32 0.0, %v843
        %845 = vmatprep.mubr.bf16.mxu0 0
        %846 = vmatmul.mubr.bf16.gmra.mxu0 %v680
        %v847 = vpop.f32.mrf.mxu0
        %v848 = vadd.f32 0.0, %v847
        %v849 = vpop.f32.mrf.mxu0
        %v850 = vadd.f32 0.0, %v849
        %v851 = vpop.f32.mrf.mxu0
        %v852 = vpop.f32.mrf.mxu0
        %853 = vdwg.mxu0
        %v870 = vunpack.c.l.b16 %v681
        %v871 = vunpack.c.h.b16 %v681
        %v872 = vunpack.c.l.b16 %v682
        %v873 = vunpack.c.h.b16 %v682
        %v874 = vunpack.c.l.b16 %v683
        %v875 = vunpack.c.h.b16 %v683
        %v876 = vunpack.c.l.b16 %v684
        %v877 = vunpack.c.h.b16 %v684
        %v878 = vunpack.c.l.b16 %v685
        %v879 = vunpack.c.h.b16 %v685
        %v880 = vunpack.c.l.b16 %v686
        %v881 = vunpack.c.h.b16 %v686
        %v882 = vunpack.c.l.b16 %v687
        %v883 = vunpack.c.h.b16 %v687
        %v884 = vunpack.c.l.b16 %v688
        %v885 = vunpack.c.h.b16 %v688
        %v886 = vunpack.c.l.b16 %v689
        %v887 = vunpack.c.h.b16 %v689
        %v888 = vunpack.c.l.b16 %v690
        %v889 = vunpack.c.h.b16 %v690
        %v890 = vunpack.c.l.b16 %v691
        %v891 = vunpack.c.h.b16 %v691
        %v892 = vunpack.c.l.b16 %v692
        %v893 = vunpack.c.h.b16 %v692
        %v894 = vunpack.c.l.b16 %v693
        %v895 = vunpack.c.h.b16 %v693
        %v896 = vunpack.c.l.b16 %v694
        %v897 = vunpack.c.h.b16 %v694
        %v898 = vunpack.c.l.b16 %v695
        %v899 = vunpack.c.h.b16 %v695
        %v900 = vunpack.c.l.b16 %v696
        %v901 = vunpack.c.h.b16 %v696
        %v902 = vpack.c.b16 %v872, %v870
        %v903 = vpack.c.b16 %v873, %v871
        %v904 = vpack.c.b16 %v876, %v874
        %v905 = vpack.c.b16 %v877, %v875
        %v906 = vpack.c.b16 %v880, %v878
        %v907 = vpack.c.b16 %v881, %v879
        %v908 = vpack.c.b16 %v884, %v882
        %v909 = vpack.c.b16 %v885, %v883
        %v910 = vpack.c.b16 %v888, %v886
        %v911 = vpack.c.b16 %v889, %v887
        %v912 = vpack.c.b16 %v892, %v890
        %v913 = vpack.c.b16 %v893, %v891
        %v914 = vpack.c.b16 %v896, %v894
        %v915 = vpack.c.b16 %v897, %v895
        %v916 = vpack.c.b16 %v900, %v898
        %v917 = vpack.c.b16 %v901, %v899
        %934 = vmatprep.subr.bf16.mxu0 %v917
        %935 = vmatpush1.bf16.msra.mxu0 %v916
        %936 = vmatprep.subr.bf16.mxu0 %v915
        %937 = vmatpush1.bf16.msra.mxu0 %v914
        %938 = vmatprep.subr.bf16.mxu0 %v913
        %939 = vmatpush1.bf16.msra.mxu0 %v912
        %940 = vmatprep.subr.bf16.mxu0 %v911
        %941 = vmatpush1.bf16.msra.mxu0 %v910
        %942 = vmatprep.subr.bf16.mxu0 %v909
        %943 = vmatpush1.bf16.msra.mxu0 %v908
        %944 = vmatprep.subr.bf16.mxu0 %v907
        %945 = vmatpush1.bf16.msra.mxu0 %v906
        %946 = vmatprep.subr.bf16.mxu0 %v905
        %947 = vmatpush1.bf16.msra.mxu0 %v904
        %948 = vmatprep.subr.bf16.mxu0 %v903
        %949 = vmatpush1.bf16.msra.mxu0 %v902
        %950 = vmatprep.subr.bf16.mxu0 0
        %951 = vmatpush2.bf16.msra.mxu0 0
        %952 = vmatprep.subr.bf16.mxu0 0
        %953 = vmatpush2.bf16.msra.mxu0 0
        %954 = vmatprep.subr.bf16.mxu0 0
        %955 = vmatpush2.bf16.msra.mxu0 0
        %956 = vmatprep.subr.bf16.mxu0 0
        %957 = vmatpush2.bf16.msra.mxu0 0
        %958 = vmatprep.subr.bf16.mxu0 0
        %959 = vmatpush2.bf16.msra.mxu0 0
        %960 = vmatprep.subr.bf16.mxu0 0
        %961 = vmatpush2.bf16.msra.mxu0 0
        %962 = vmatprep.subr.bf16.mxu0 0
        %963 = vmatpush2.bf16.msra.mxu0 0
        %964 = vmatprep.subr.bf16.mxu0 0
        %965 = vmatpush2.bf16.msra.mxu0 0
        %966 = vmatprep.mubr.bf16.mxu0 0
        %967 = vmatmul.mubr.bf16.gmra.mxu0 %v670
        %v968 = vpop.f32.mrf.mxu0
        %v969 = vadd.f32 %v828, %v968
        %v970 = vpop.f32.mrf.mxu0
        %v971 = vadd.f32 %v830, %v970
        %v972 = vpop.f32.mrf.mxu0
        %v973 = vadd.f32 %v832, %v972
        %v974 = vpop.f32.mrf.mxu0
        %v975 = vadd.f32 %v834, %v974
        %976 = vmatprep.mubr.bf16.mxu0 0
        %977 = vmatmul.mubr.bf16.gmra.mxu0 %v671
        %v978 = vpop.f32.mrf.mxu0
        %v979 = vadd.f32 %v838, %v978
        %v980 = vpop.f32.mrf.mxu0
        %v981 = vadd.f32 %v840, %v980
        %v982 = vpop.f32.mrf.mxu0
        %v983 = vadd.f32 %v842, %v982
        %v984 = vpop.f32.mrf.mxu0
        %v985 = vadd.f32 %v844, %v984
        %986 = vmatprep.mubr.bf16.mxu0 0
        %987 = vmatmul.mubr.bf16.gmra.mxu0 %v672
        %v988 = vpop.f32.mrf.mxu0
        %v989 = vadd.f32 %v848, %v988
        %v990 = vpop.f32.mrf.mxu0
        %v991 = vadd.f32 %v850, %v990
        %v992 = vpop.f32.mrf.mxu0
        %v993 = vpop.f32.mrf.mxu0
        %994 = vdwg.mxu0
        %995 = vst [vmem:[%s287] sm:$0xff] %v969
        %996 = vst [vmem:[%s287 + $0x8] sm:$0xff] %v971
        %997 = vst [vmem:[%s287 + $0x10] sm:$0xff] %v973
        %998 = vst [vmem:[%s287 + $0x18] sm:$0xff] %v975
        %999 = vst [vmem:[%s287 + $0x20] sm:$0xff] %v979
        %1000 = vst [vmem:[%s287 + $0x28] sm:$0xff] %v981
        %1001 = vst [vmem:[%s287 + $0x30] sm:$0xff] %v983
        %1002 = vst [vmem:[%s287 + $0x38] sm:$0xff] %v985
        %1003 = vst [vmem:[%s287 + $0x40] sm:$0xff] %v989
        %1004 = vst [vmem:[%s287 + $0x48] sm:$0xff] %v991
        %s1005 = sand.u32 %s142, 1
        %s1006 = scalar_lea.sflag [#allocation4], %s1005
        %s1007 = sand.u32 %s142, 1
        %s1008 = smul.addr %s1007, 80
        %s1009 = scalar_lea.vmem [#allocation10], %s1008
        // Predicated region
        $region57: #{tpu_custom_call.1} parent=39 // pred_check
          %p1010 = pneg %p152
        $region58: #{tpu_custom_call.1} parent=39 // pred_check_branch
          %1012 = sbr.rel (%p1010) target = $region60
        $region59: #{tpu_custom_call.1} parent=39 // pred_region
          %s1013 = smul.u32 5, %s24
          %s1015 = ssub.s32 1280, 1280
          %1016 = vsyncadd %s1006, %s1015
          %s1017 = smul.addr %s1013, 2
          %s1018 = smul.addr %s1017, 128
          %s1019 = scalar_lea.hbm %s5, %s1018
          %s1020 = sshll.u32 %s1009, 4
          %s1021 = int_to_ptr.vmem [resolvable:$true] %s1020
          %1026 = dma.vmem_to_hbm [thread:$0]  %s1021, 1280, %s1019, %s1006, 256, 256, 16
        $region60: #{tpu_custom_call.1} parent=39 // pred_fallthru
          _
      $region40: #{tpu_custom_call.1} parent=5 // pred_fallthru
        _
      %p1027 = scmp.le.s32.totalorder 2, %s19
      // Predicated region
      $region61: #{tpu_custom_call.1} parent=5 // pred_check
        %p1028 = pneg %p1027
      $region62: #{tpu_custom_call.1} parent=5 // pred_check_branch
        %1030 = sbr.rel (%p1028) target = $region64
      $region63: #{tpu_custom_call.1} parent=5 // pred_region
        %s1031 = ssub.s32 %s19, 2
        // Predicated region
        $region65: #{tpu_custom_call.1} parent=63 // pred_check
          %p1032 = pneg %p158
        $region66: #{tpu_custom_call.1} parent=63 // pred_check_branch
          %1034 = sbr.rel (%p1032) target = $region68
        $region67: #{tpu_custom_call.1} parent=63 // pred_region
          %s1035 = sand.u32 %s143, 1
          %s1036 = scalar_lea.sflag [#allocation4], %s1035
          %s1037 = sand.u32 %s143, 1
          %s1038 = smul.addr %s1037, 80
          %s1039 = scalar_lea.vmem [#allocation10], %s1038
          %1040 = dma.done %s1036, 1280
        $region68: #{tpu_custom_call.1} parent=63 // pred_fallthru
          _
      $region64: #{tpu_custom_call.1} parent=5 // pred_fallthru
        _
    $region6: #{tpu_custom_call.1} parent=1 // loop_footer
      %s23 = sadd.s32 1, %s19
    $region7: #{tpu_custom_call.1} parent=1 // loop_footer_branch
      %18 = sbr.rel target = $region3
    $region8: #{tpu_custom_call.1} parent=1 // loop_exit
      _
    %1041 = vsyncpa [#allocation3], 1
    %s1042 = scalar_lea.sflag [#allocation3], 1
    %1043 = vsyncpa %s1042, 1
    %1044 = vsyncpa [#allocation6], 1
    %1045 = vsyncpa [#allocation9], 1
    %1046 = vsyncpa [#allocation4], 1
    %s1047 = scalar_lea.sflag [#allocation4], 1
    %1048 = vsyncpa %s1047, 1

</llo_original>
